<compile_context>
chip_gen: v5e
topology: v5e:2x2
jax: 0.10.0
libtpu: 0.0.40
codegen_flags: <defaults>
</compile_context>

<pallas_src>
import functools

import jax
import jax.numpy as jnp
import numpy as np
from jax.experimental import pallas as pl
from jax.experimental.pallas import tpu as pltpu


def _rup8(v):
    return -(-v // 8) * 8


# ----------------------------------------------------------------------------
# The single fused kernel (grid = (), whole batch handled inside).
# ----------------------------------------------------------------------------
def _fused_kernel(ex_ref, xwt_ref, pi_ref, m1_ref, m2_ref, csml_ref, o_ref, *,
                  n, d, batch, dim_in, o_half, link_len, hwc, f1, m2_offs, segs):
    f32 = jnp.float32

    def seg(name):
        r0, nr, nc = segs[name]
        return csml_ref[r0:r0 + nr, 0:nc]

    e = ex_ref[:, 0:d]                                    # [N, D]
    x2 = ex_ref[:, d:d + batch * dim_in]                  # [N, B*C]

    # --- supports = softmax(relu(E E^T), axis=1) ---------------------------
    a = jax.lax.dot_general(e, e, (((1,), (1,)), ((), ())),
                            preferred_element_type=f32)   # [N, N]
    a = jnp.maximum(a, 0.0)
    a = a - jnp.max(a, axis=1, keepdims=True)
    ea = jnp.exp(a)
    # exact reciprocal; flip to approx=True (free EUP slot) when tolerance allows
    s = ea * pl.reciprocal(jnp.sum(ea, axis=1, keepdims=True))

    # --- per-node parameters (b/o-tiled layouts, one matmul each) -----------
    wg = jnp.dot(e, seg("wp"), preferred_element_type=f32)     # [N, B*O*K*C]
    wwin = jnp.dot(e, seg("ww"), preferred_element_type=f32)   # [N, B*O*Iw]
    bias = jnp.dot(e, seg("bp"), preferred_element_type=f32)   # [N, B*J]

    # --- incremental graph conv: xg_k = S @ xg_{k-1} ------------------------
    xg_list = [x2]
    for _ in range(1, link_len):
        xg_list.append(jnp.dot(s, xg_list[-1], preferred_element_type=f32))
    xg_full = jnp.concatenate(xg_list, axis=1)                       # [N, K*B*C]
    tile_xg = jnp.dot(xg_full, seg("gm"), preferred_element_type=f32)  # [N, B*O*K*C]
    out_g = jnp.dot(tile_xg * wg, seg("rg"), preferred_element_type=f32)  # [N, B*J]

    # --- window conv: lane-dense T fold + MXU block-sum reduce --------------
    xw = xwt_ref[0:n, :]                                             # [N, Tw*B*Iw]
    trow = xwt_ref[n:n + 1, :]                                       # [1, Tw*B*Iw]
    xw_tiled = jnp.dot(xw * trow, seg("gw"), preferred_element_type=f32)   # [N, B*O*Iw]
    out_w = jnp.dot(xw_tiled * wwin, seg("rw"), preferred_element_type=f32)  # [N, B*J]

    # --- CNN head (3x3/s2 convs folded into dense matmuls at init) ----------
    r_b2, r_wfct, r_bfc = m2_offs
    m1 = m1_ref[0:hwc, :]                                            # [HWC, F1]
    b1f = m1_ref[hwc:hwc + 1, :]                                     # [1, F1]
    h1 = jnp.maximum(jnp.dot(pi_ref[...], m1, preferred_element_type=f32) + b1f, 0.0)
    m2 = m2_ref[0:f1, :]                                             # [F1, F2]
    b2f = m2_ref[r_b2:r_b2 + 1, :]                                   # [1, F2]
    wfct = m2_ref[r_wfct:r_wfct + o_half, :]                         # [O, F2]
    bfc = m2_ref[r_bfc:r_bfc + 1, 0:o_half]                          # [1, O]
    h2 = jnp.maximum(jnp.dot(h1, m2, preferred_element_type=f32) + b2f, 0.0)
    topo = jax.lax.dot_general(h2, wfct, (((1,), (1,)), ((), ())),
                               preferred_element_type=f32) + bfc     # [B, O]

    # --- gate both halves by topo[b, o], add bias, single full-ref store ----
    pieces = []
    for b in range(batch):
        row = topo[b:b + 1, :]                                       # [1, O]
        pieces.append(row)
        pieces.append(row)
    topo_dup = jnp.concatenate(pieces, axis=1)                       # [1, B*J]

    o_ref[...] = ((out_g + out_w) * topo_dup + bias).astype(o_ref.dtype)


# ----------------------------------------------------------------------------
# Weight-only preprocessing (init-time; NOT in the jitted forward).
# ----------------------------------------------------------------------------
def _im2col(x_nhwc, k, stride, pad, xp=jnp):
    b, h, w, c = x_nhwc.shape
    xpd = xp.pad(x_nhwc, ((0, 0), (pad, pad), (pad, pad), (0, 0)))
    ho = (h + 2 * pad - k) // stride + 1
    wo = (w + 2 * pad - k) // stride + 1
    cols = []
    for di in range(k):
        for dj in range(k):
            cols.append(xpd[:, di:di + (ho - 1) * stride + 1:stride,
                            dj:dj + (wo - 1) * stride + 1:stride, :])
    patches = xp.stack(cols, axis=3)                    # [B, Ho, Wo, k*k, C]
    return patches.reshape(b, ho * wo, k * k * c), ho, wo


def _conv_as_dense_np(w_flat, b_vec, h, w, cin, k=3, stride=2, pad=1):
    """Dense M s.t. conv(x) (NHWC-flat) == x_flat @ M + b_full (weight-only fold)."""
    cout = w_flat.shape[1]
    eye_imgs = np.eye(h * w * cin, dtype=np.float32).reshape(h * w * cin, h, w, cin)
    patches, ho, wo = _im2col(eye_imgs, k, stride, pad, xp=np)
    m = np.einsum("pqf,fo->pqo", patches, w_flat).reshape(h * w * cin, ho * wo * cout)
    b_full = np.tile(b_vec, ho * wo)
    return m.astype(np.float32), b_full.astype(np.float32), ho, wo


def build_tflsgcn_constants(params, *, batch, node_num, dim_in, dim_out,
                            window_len, link_len, embed_dim, pi_shape):
    """Run ONCE at init: folds convs to dense, tiles pool weights, builds the
    constant 0/1 tiling / block-sum matrices, and packs everything into three
    buffers so the kernel sees few DMAs and only static ref slices."""
    del node_num  # not needed for the weight-only folds
    B, C, J = batch, dim_in, dim_out
    O, Tw, K, D = J // 2, window_len, link_len, embed_dim
    cin, H, W = pi_shape

    wp = np.asarray(params["weights_pool"], np.float32)       # [D, K, C, O]
    ww = np.asarray(params["weights_window"], np.float32)     # [D, Iw, O]
    bp = np.asarray(params["bias_pool"], np.float32)          # [D, J]
    Iw = ww.shape[1]

    # b/o-tiled pool layouts (columns ordered (b, o, k, c) / (b, o, i) / (b, j))
    wp_tiled = np.tile(wp.transpose(0, 3, 1, 2).reshape(D, O * K * C), (1, B))
    ww_tiled = np.tile(ww.transpose(0, 2, 1).reshape(D, O * Iw), (1, B))
    bp_tiled = np.tile(bp, (1, B))

    # constant 0/1 tiling & block-sum matrices for the combine stage
    gmat = np.zeros((K, B, C, B, O, K, C), np.float32)
    for k in range(K):
        for b in range(B):
            for c in range(C):
                gmat[k, b, c, b, :, k, c] = 1.0
    gmat = gmat.reshape(K * B * C, B * O * K * C)

    rg = np.zeros((B, O, K, C, B, 2, O), np.float32)
    for b in range(B):
        for o in range(O):
            rg[b, o, :, :, b, 0, o] = 1.0
    rg = rg.reshape(B * O * K * C, B * J)

    gw = np.zeros((Tw, B, Iw, B, O, Iw), np.float32)
    for b in range(B):
        for i in range(Iw):
            gw[:, b, i, b, :, i] = 1.0
    gw = gw.reshape(Tw * B * Iw, B * O * Iw)

    rw = np.zeros((B, O, Iw, B, 2, O), np.float32)
    for b in range(B):
        for o in range(O):
            rw[b, o, :, b, 1, o] = 1.0
    rw = rw.reshape(B * O * Iw, B * J)

    # CNN conv -> dense fold (weight-only)
    w1 = np.asarray(params["cnn_w1"], np.float32)
    b1 = np.asarray(params["cnn_b1"], np.float32)
    w2 = np.asarray(params["cnn_w2"], np.float32)
    b2 = np.asarray(params["cnn_b2"], np.float32)
    wfc = np.asarray(params["cnn_wfc"], np.float32)
    bfc = np.asarray(params["cnn_bfc"], np.float32)
    m1, b1f, h1, w1o = _conv_as_dense_np(w1, b1, H, W, cin)
    m2, b2f, _, _ = _conv_as_dense_np(w2, b2, h1, w1o, w1.shape[1])
    hwc, f1 = m1.shape
    f2 = m2.shape[1]
    assert m2.shape[0] == f1 and wfc.shape == (f2, O) and bfc.shape == (O,)
    # v7x VMEM cliff guard (64 MiB physical / 32 MiB default scoped)
    assert (m1.nbytes + m2.nbytes) < (8 << 20), \
        "conv-as-dense fold too large for VMEM; tile the CNN head instead"

    # pack #1: folded conv-1 (+ its bias row), 256 lanes
    m1pack = np.zeros((_rup8(hwc + 1), f1), np.float32)
    m1pack[:hwc] = m1
    m1pack[hwc] = b1f

    # pack #2: folded conv-2 + bias + fc weights/bias, 128 lanes
    r_b2 = f1
    r_wfct = _rup8(f1 + 1)
    r_bfc = _rup8(r_wfct + O)
    m2pack = np.zeros((_rup8(r_bfc + 1), f2), np.float32)
    m2pack[:f1] = m2
    m2pack[r_b2] = b2f
    m2pack[r_wfct:r_wfct + O] = wfc.T
    m2pack[r_bfc, :O] = bfc

    # pack #3: all remaining small constants, one padded buffer, static slices
    segs_src = [("wp", wp_tiled), ("gm", gmat), ("rg", rg), ("ww", ww_tiled),
                ("bp", bp_tiled), ("gw", gw), ("rw", rw)]
    lane = max(a.shape[1] for _, a in segs_src)
    offs = {}
    r = 0
    for name, arr in segs_src:
        offs[name] = (r, int(arr.shape[0]), int(arr.shape[1]))
        r = _rup8(r + arr.shape[0])
    csml = np.zeros((r, lane), np.float32)
    for name, arr in segs_src:
        r0, nr, nc = offs[name]
        csml[r0:r0 + nr, :nc] = arr

    consts = dict(m1pack=jnp.asarray(m1pack), m2pack=jnp.asarray(m2pack),
                  csml=jnp.asarray(csml))
    meta = dict(link_len=K, dim_out=J, hwc=int(hwc), f1=int(f1),
                m2_offs=(int(r_b2), int(r_wfct), int(r_bfc)), segs=offs)
    return consts, meta


# ----------------------------------------------------------------------------
# Full forward: cheap per-call layout plumbing + one pallas_call.
# ----------------------------------------------------------------------------
def tflsgcn_cnn_forward(x, x_window, node_embeddings, zigzag_pi, t_param, consts,
                        *, meta):
    b, n, c = x.shape
    tw, iw = x_window.shape[1], x_window.shape[3]
    d = node_embeddings.shape[1]
    dim_out = meta["dim_out"]
    o_half = dim_out // 2

    # dynamic layout plumbing (tiny; heavy weight-only prep is in the builder)
    x2 = jnp.transpose(x, (1, 0, 2)).reshape(n, b * c)                  # [N, B*C]
    ex = jnp.concatenate([node_embeddings.astype(jnp.float32), x2], axis=1)
    xw = jnp.transpose(x_window, (2, 1, 0, 3)).reshape(n, tw * b * iw)  # [N, Tw*B*Iw]
    trow = jnp.repeat(t_param.astype(jnp.float32), b * iw).reshape(1, tw * b * iw)
    xwt = jnp.concatenate([xw, trow], axis=0)                           # [N+1, Tw*B*Iw]
    pi = jnp.transpose(zigzag_pi, (0, 2, 3, 1)).reshape(b, -1)          # [B, H*W*Cin]

    kernel = functools.partial(
        _fused_kernel, n=n, d=d, batch=b, dim_in=c, o_half=o_half,
        link_len=meta["link_len"], hwc=meta["hwc"], f1=meta["f1"],
        m2_offs=meta["m2_offs"], segs=meta["segs"])

    vmem = pltpu.MemorySpace.VMEM
    # TODO(synk): if B/N are scaled up, add a "parallel" grid axis
    #             (pltpu.CompilerParams(dimension_semantics=...)) so v7x's second
    #             TensorCore is used; at these toy sizes grid=() is best.
    out = pl.pallas_call(
        kernel,
        out_shape=jax.ShapeDtypeStruct((n, b * dim_out), jnp.float32),
        in_specs=[pl.BlockSpec(memory_space=vmem)] * 6,
        out_specs=pl.BlockSpec(memory_space=vmem),
    )(ex, xwt, pi, consts["m1pack"], consts["m2pack"], consts["csml"])
    return out.reshape(n, b, dim_out).transpose(1, 0, 2)


# ----------------------------------------------------------------------------
# Pure-JAX reference (mirrors the PyTorch forward exactly) for verification
# ----------------------------------------------------------------------------
def _cnn_reference(pi_nchw, params):
    x = jnp.transpose(pi_nchw, (0, 2, 3, 1))
    b = x.shape[0]
    p1, h1, w1 = _im2col(x, 3, 2, 1)
    c1 = jnp.maximum(p1.reshape(-1, p1.shape[-1]) @ params["cnn_w1"] + params["cnn_b1"], 0.0)
    c1 = c1.reshape(b, h1, w1, -1)
    p2, _, _ = _im2col(c1, 3, 2, 1)
    c2 = jnp.maximum(p2.reshape(-1, p2.shape[-1]) @ params["cnn_w2"] + params["cnn_b2"], 0.0)
    c2 = c2.reshape(b, -1)
    return c2 @ params["cnn_wfc"] + params["cnn_bfc"]


def reference_forward(x, x_window, node_embeddings, zigzag_pi, params, link_len):
    e = node_embeddings
    n = e.shape[0]
    supports = jax.nn.softmax(jnp.maximum(e @ e.T, 0.0), axis=1)
    sup_set = [jnp.eye(n, dtype=jnp.float32), supports]
    for kk in range(2, link_len):
        sup_set.append(supports @ sup_set[kk - 1])
    sup = jnp.stack(sup_set, axis=0)
    weights = jnp.einsum("nd,dkio->nkio", e, params["weights_pool"])
    bias = e @ params["bias_pool"]
    x_g = jnp.einsum("knm,bmc->bknc", sup, x).transpose(0, 2, 1, 3)
    x_gconv = jnp.einsum("bnki,nkio->bno", x_g, weights)
    ww = jnp.einsum("nd,dio->nio", e, params["weights_window"])
    x_w = jnp.einsum("btni,nio->btno", x_window, ww).transpose(0, 2, 3, 1)
    x_wconv = x_w @ params["T"]
    topo = _cnn_reference(zigzag_pi, params)
    x_tg = x_gconv * topo[:, None, :]
    x_tw = x_wconv * topo[:, None, :]
    return jnp.concatenate([x_tg, x_tw], axis=-1) + bias[None, :, :]


# ----------------------------------------------------------------------------
# Main
# ----------------------------------------------------------------------------
if __name__ == "__main__":
    # module hyper-parameters
    B, N, DIM_IN, DIM_OUT = 2, 16, 4, 8
    WINDOW_LEN, LINK_LEN, EMBED_DIM = 8, 3, 8
    O_HALF = DIM_OUT // 2
    IW = 1 if (DIM_IN - 1) % 16 == 0 else DIM_IN // 2      # matches __init__ branch
    H = W = 16                                              # zigzag persistence image size

    key = jax.random.PRNGKey(0)
    keys = jax.random.split(key, 16)

    params = {
        "weights_pool":   0.1 * jax.random.normal(keys[0], (EMBED_DIM, LINK_LEN, DIM_IN, O_HALF), jnp.float32),
        "weights_window": 0.1 * jax.random.normal(keys[1], (EMBED_DIM, IW, O_HALF), jnp.float32),
        "bias_pool":      0.1 * jax.random.normal(keys[2], (EMBED_DIM, DIM_OUT), jnp.float32),
        "T":              0.1 * jax.random.normal(keys[3], (WINDOW_LEN,), jnp.float32),
        # representative CNN head (see TODO above): 1->4->8 channels, fc -> dim_out/2
        "cnn_w1":  0.1 * jax.random.normal(keys[4], (3 * 3 * 1, 4), jnp.float32),
        "cnn_b1":  0.1 * jax.random.normal(keys[5], (4,), jnp.float32),
        "cnn_w2":  0.1 * jax.random.normal(keys[6], (3 * 3 * 4, 8), jnp.float32),
        "cnn_b2":  0.1 * jax.random.normal(keys[7], (8,), jnp.float32),
        "cnn_wfc": 0.1 * jax.random.normal(keys[8], (8 * (H // 4) * (W // 4), O_HALF), jnp.float32),
        "cnn_bfc": 0.1 * jax.random.normal(keys[9], (O_HALF,), jnp.float32),
    }

    x = jax.random.normal(keys[10], (B, N, DIM_IN), jnp.float32)
    x_window = jax.random.normal(keys[11], (B, WINDOW_LEN, N, IW), jnp.float32)
    node_embeddings = jax.random.normal(keys[12], (N, EMBED_DIM), jnp.float32)
    zigzag_pi = jax.random.uniform(keys[13], (B, 1, H, W), jnp.float32)     # NCHW like PyTorch

    # init-time weight-only preprocessing (outside the jitted path)
    consts, meta = build_tflsgcn_constants(
        params, batch=B, node_num=N, dim_in=DIM_IN, dim_out=DIM_OUT,
        window_len=WINDOW_LEN, link_len=LINK_LEN, embed_dim=EMBED_DIM,
        pi_shape=(1, H, W))

    fwd = jax.jit(functools.partial(tflsgcn_cnn_forward, meta=meta))
    out = fwd(x, x_window, node_embeddings, zigzag_pi, params["T"], consts)
    out = jax.block_until_ready(out)

    ref = reference_forward(x, x_window, node_embeddings, zigzag_pi, params, LINK_LEN)
    ref = jax.block_until_ready(ref)

    assert out.shape == (B, N, DIM_OUT), out.shape
    err = float(jnp.max(jnp.abs(out - ref)))
    assert np.isfinite(err) and err < 1e-3, f"max abs err {err}"
    print("KERNEL_OK")
</pallas_src>

<mosaic_0001>
module attributes {stable_mosaic.version = 11 : i64} {
  func.func @_fused_kernel(%arg0: memref<16x16xf32, #tpu.memory_space<vmem>>, %arg1: memref<17x32xf32, #tpu.memory_space<vmem>>, %arg2: memref<2x256xf32, #tpu.memory_space<vmem>>, %arg3: memref<264x256xf32, #tpu.memory_space<vmem>>, %arg4: memref<280x128xf32, #tpu.memory_space<vmem>>, %arg5: memref<192x96xf32, #tpu.memory_space<vmem>>, %arg6: memref<16x16xf32, #tpu.memory_space<vmem>>) attributes {dimension_semantics = [], scalar_prefetch = 0 : i64, scratch_operands = 0 : i64, tpu.core_type = #tpu.core_type<tc>} {
    %c0 = arith.constant 0 : index
    %c0_0 = arith.constant 0 : index
    %0 = vector.load %arg0[%c0, %c0_0] : memref<16x16xf32, #tpu.memory_space<vmem>>, vector<16x8xf32>
    %c0_1 = arith.constant 0 : index
    %c8 = arith.constant 8 : index
    %1 = vector.load %arg0[%c0_1, %c8] : memref<16x16xf32, #tpu.memory_space<vmem>>, vector<16x8xf32>
    %cst = arith.constant dense<0.000000e+00> : vector<16x16xf32>
    %2 = tpu.matmul %0, %0, %cst {dimension_numbers = #tpu.dot_dimension_numbers<[1], [1], [0], [0], [0, 0, 1, 0], [], []>} : vector<16x8xf32>, vector<16x8xf32>, vector<16x16xf32> -> vector<16x16xf32>
    %cst_2 = arith.constant 0.000000e+00 : f32
    %3 = vector.broadcast %cst_2 : f32 to vector<16x16xf32>
    %4 = arith.maximumf %2, %3 : vector<16x16xf32>
    %cst_3 = arith.constant dense<0xFF800000> : vector<16xf32>
    %5 = vector.multi_reduction <maximumf>, %4, %cst_3 [1] : vector<16x16xf32> to vector<16xf32>
    %6 = vector.shape_cast %5 : vector<16xf32> to vector<16x1xf32>
    %7 = vector.broadcast %6 : vector<16x1xf32> to vector<16x16xf32>
    %8 = arith.subf %4, %7 : vector<16x16xf32>
    %9 = math.exp %8 : vector<16x16xf32>
    %cst_4 = arith.constant dense<0.000000e+00> : vector<16xf32>
    %10 = vector.multi_reduction <add>, %9, %cst_4 [1] : vector<16x16xf32> to vector<16xf32>
    %11 = vector.shape_cast %10 : vector<16xf32> to vector<16x1xf32>
    %12 = tpu.reciprocal %11 : vector<16x1xf32> -> vector<16x1xf32>
    %13 = vector.broadcast %12 : vector<16x1xf32> to vector<16x16xf32>
    %14 = arith.mulf %9, %13 : vector<16x16xf32>
    %c0_5 = arith.constant 0 : index
    %c0_6 = arith.constant 0 : index
    %15 = vector.load %arg5[%c0_5, %c0_6] : memref<192x96xf32, #tpu.memory_space<vmem>>, vector<8x96xf32>
    %cst_7 = arith.constant dense<0.000000e+00> : vector<16x96xf32>
    %16 = tpu.matmul %0, %15, %cst_7 {dimension_numbers = #tpu.dot_dimension_numbers<[1], [0], [0], [1], [0, 0, 1, 1], [], []>} : vector<16x8xf32>, vector<8x96xf32>, vector<16x96xf32> -> vector<16x96xf32>
    %c128 = arith.constant 128 : index
    %c0_8 = arith.constant 0 : index
    %17 = vector.load %arg5[%c128, %c0_8] : memref<192x96xf32, #tpu.memory_space<vmem>>, vector<8x16xf32>
    %cst_9 = arith.constant dense<0.000000e+00> : vector<16x16xf32>
    %18 = tpu.matmul %0, %17, %cst_9 {dimension_numbers = #tpu.dot_dimension_numbers<[1], [0], [0], [1], [0, 0, 1, 1], [], []>} : vector<16x8xf32>, vector<8x16xf32>, vector<16x16xf32> -> vector<16x16xf32>
    %c136 = arith.constant 136 : index
    %c0_10 = arith.constant 0 : index
    %19 = vector.load %arg5[%c136, %c0_10] : memref<192x96xf32, #tpu.memory_space<vmem>>, vector<8x16xf32>
    %cst_11 = arith.constant dense<0.000000e+00> : vector<16x16xf32>
    %20 = tpu.matmul %0, %19, %cst_11 {dimension_numbers = #tpu.dot_dimension_numbers<[1], [0], [0], [1], [0, 0, 1, 1], [], []>} : vector<16x8xf32>, vector<8x16xf32>, vector<16x16xf32> -> vector<16x16xf32>
    %cst_12 = arith.constant dense<0.000000e+00> : vector<16x8xf32>
    %21 = tpu.matmul %14, %1, %cst_12 {dimension_numbers = #tpu.dot_dimension_numbers<[1], [0], [0], [1], [0, 0, 1, 1], [], []>} : vector<16x16xf32>, vector<16x8xf32>, vector<16x8xf32> -> vector<16x8xf32>
    %cst_13 = arith.constant dense<0.000000e+00> : vector<16x8xf32>
    %22 = tpu.matmul %14, %21, %cst_13 {dimension_numbers = #tpu.dot_dimension_numbers<[1], [0], [0], [1], [0, 0, 1, 1], [], []>} : vector<16x16xf32>, vector<16x8xf32>, vector<16x8xf32> -> vector<16x8xf32>
    %23 = tpu.concatenate %1, %21, %22 in 1 : vector<16x8xf32>, vector<16x8xf32>, vector<16x8xf32> -> vector<16x24xf32>
    %c8_14 = arith.constant 8 : index
    %c0_15 = arith.constant 0 : index
    %24 = vector.load %arg5[%c8_14, %c0_15] : memref<192x96xf32, #tpu.memory_space<vmem>>, vector<24x96xf32>
    %cst_16 = arith.constant dense<0.000000e+00> : vector<16x96xf32>
    %25 = tpu.matmul %23, %24, %cst_16 {dimension_numbers = #tpu.dot_dimension_numbers<[1], [0], [0], [1], [0, 0, 1, 1], [], []>} : vector<16x24xf32>, vector<24x96xf32>, vector<16x96xf32> -> vector<16x96xf32>
    %26 = arith.mulf %25, %16 : vector<16x96xf32>
    %c32 = arith.constant 32 : index
    %c0_17 = arith.constant 0 : index
    %27 = vector.load %arg5[%c32, %c0_17] : memref<192x96xf32, #tpu.memory_space<vmem>>, vector<96x16xf32>
    %cst_18 = arith.constant dense<0.000000e+00> : vector<16x16xf32>
    %28 = tpu.matmul %26, %27, %cst_18 {dimension_numbers = #tpu.dot_dimension_numbers<[1], [0], [0], [1], [0, 0, 1, 1], [], []>} : vector<16x96xf32>, vector<96x16xf32>, vector<16x16xf32> -> vector<16x16xf32>
    %c0_19 = arith.constant 0 : index
    %c0_20 = arith.constant 0 : index
    %29 = vector.load %arg1[%c0_19, %c0_20] : memref<17x32xf32, #tpu.memory_space<vmem>>, vector<16x32xf32>
    %c16 = arith.constant 16 : index
    %c0_21 = arith.constant 0 : index
    %30 = vector.load %arg1[%c16, %c0_21] : memref<17x32xf32, #tpu.memory_space<vmem>>, vector<1x32xf32>
    %31 = vector.broadcast %30 : vector<1x32xf32> to vector<16x32xf32>
    %32 = arith.mulf %29, %31 : vector<16x32xf32>
    %c144 = arith.constant 144 : index
    %c0_22 = arith.constant 0 : index
    %33 = vector.load %arg5[%c144, %c0_22] : memref<192x96xf32, #tpu.memory_space<vmem>>, vector<32x16xf32>
    %cst_23 = arith.constant dense<0.000000e+00> : vector<16x16xf32>
    %34 = tpu.matmul %32, %33, %cst_23 {dimension_numbers = #tpu.dot_dimension_numbers<[1], [0], [0], [1], [0, 0, 1, 1], [], []>} : vector<16x32xf32>, vector<32x16xf32>, vector<16x16xf32> -> vector<16x16xf32>
    %35 = arith.mulf %34, %18 : vector<16x16xf32>
    %c176 = arith.constant 176 : index
    %c0_24 = arith.constant 0 : index
    %36 = vector.load %arg5[%c176, %c0_24] : memref<192x96xf32, #tpu.memory_space<vmem>>, vector<16x16xf32>
    %cst_25 = arith.constant dense<0.000000e+00> : vector<16x16xf32>
    %37 = tpu.matmul %35, %36, %cst_25 {dimension_numbers = #tpu.dot_dimension_numbers<[1], [0], [0], [1], [0, 0, 1, 1], [], []>} : vector<16x16xf32>, vector<16x16xf32>, vector<16x16xf32> -> vector<16x16xf32>
    %c0_26 = arith.constant 0 : index
    %c0_27 = arith.constant 0 : index
    %38 = vector.load %arg3[%c0_26, %c0_27] : memref<264x256xf32, #tpu.memory_space<vmem>>, vector<256x256xf32>
    %c256 = arith.constant 256 : index
    %c0_28 = arith.constant 0 : index
    %39 = vector.load %arg3[%c256, %c0_28] : memref<264x256xf32, #tpu.memory_space<vmem>>, vector<1x256xf32>
    %c0_29 = arith.constant 0 : index
    %c0_30 = arith.constant 0 : index
    %40 = vector.load %arg2[%c0_29, %c0_30] : memref<2x256xf32, #tpu.memory_space<vmem>>, vector<2x256xf32>
    %cst_31 = arith.constant dense<0.000000e+00> : vector<2x256xf32>
    %41 = tpu.matmul %40, %38, %cst_31 {dimension_numbers = #tpu.dot_dimension_numbers<[1], [0], [0], [1], [0, 0, 1, 1], [], []>} : vector<2x256xf32>, vector<256x256xf32>, vector<2x256xf32> -> vector<2x256xf32>
    %42 = vector.broadcast %39 : vector<1x256xf32> to vector<2x256xf32>
    %43 = arith.addf %41, %42 : vector<2x256xf32>
    %cst_32 = arith.constant 0.000000e+00 : f32
    %44 = vector.broadcast %cst_32 : f32 to vector<2x256xf32>
    %45 = arith.maximumf %43, %44 : vector<2x256xf32>
    %c0_33 = arith.constant 0 : index
    %c0_34 = arith.constant 0 : index
    %46 = vector.load %arg4[%c0_33, %c0_34] : memref<280x128xf32, #tpu.memory_space<vmem>>, vector<256x128xf32>
    %c256_35 = arith.constant 256 : index
    %c0_36 = arith.constant 0 : index
    %47 = vector.load %arg4[%c256_35, %c0_36] : memref<280x128xf32, #tpu.memory_space<vmem>>, vector<1x128xf32>
    %c264 = arith.constant 264 : index
    %c0_37 = arith.constant 0 : index
    %48 = vector.load %arg4[%c264, %c0_37] : memref<280x128xf32, #tpu.memory_space<vmem>>, vector<4x128xf32>
    %c272 = arith.constant 272 : index
    %c0_38 = arith.constant 0 : index
    %49 = vector.load %arg4[%c272, %c0_38] : memref<280x128xf32, #tpu.memory_space<vmem>>, vector<1x4xf32>
    %cst_39 = arith.constant dense<0.000000e+00> : vector<2x128xf32>
    %50 = tpu.matmul %45, %46, %cst_39 {dimension_numbers = #tpu.dot_dimension_numbers<[1], [0], [0], [1], [0, 0, 1, 1], [], []>} : vector<2x256xf32>, vector<256x128xf32>, vector<2x128xf32> -> vector<2x128xf32>
    %51 = vector.broadcast %47 : vector<1x128xf32> to vector<2x128xf32>
    %52 = arith.addf %50, %51 : vector<2x128xf32>
    %cst_40 = arith.constant 0.000000e+00 : f32
    %53 = vector.broadcast %cst_40 : f32 to vector<2x128xf32>
    %54 = arith.maximumf %52, %53 : vector<2x128xf32>
    %cst_41 = arith.constant dense<0.000000e+00> : vector<2x4xf32>
    %55 = tpu.matmul %54, %48, %cst_41 {dimension_numbers = #tpu.dot_dimension_numbers<[1], [1], [0], [0], [0, 0, 1, 0], [], []>} : vector<2x128xf32>, vector<4x128xf32>, vector<2x4xf32> -> vector<2x4xf32>
    %56 = vector.broadcast %49 : vector<1x4xf32> to vector<2x4xf32>
    %57 = arith.addf %55, %56 : vector<2x4xf32>
    %58 = vector.extract_strided_slice %57 {offsets = [0, 0], sizes = [1, 4], strides = [1, 1]} : vector<2x4xf32> to vector<1x4xf32>
    %59 = vector.extract_strided_slice %57 {offsets = [1, 0], sizes = [1, 4], strides = [1, 1]} : vector<2x4xf32> to vector<1x4xf32>
    %60 = tpu.concatenate %58, %58, %59, %59 in 1 : vector<1x4xf32>, vector<1x4xf32>, vector<1x4xf32>, vector<1x4xf32> -> vector<1x16xf32>
    %61 = arith.addf %28, %37 : vector<16x16xf32>
    %62 = vector.broadcast %60 : vector<1x16xf32> to vector<16x16xf32>
    %63 = arith.mulf %61, %62 : vector<16x16xf32>
    %64 = arith.addf %63, %20 : vector<16x16xf32>
    %c0_42 = arith.constant 0 : index
    %c0_43 = arith.constant 0 : index
    %65 = vector.load %arg6[%c0_42, %c0_43] : memref<16x16xf32, #tpu.memory_space<vmem>>, vector<16x16xf32>
    tpu.vector_store %arg6[%c0_42, %c0_43], %64 {strides = array<i32>} : memref<16x16xf32, #tpu.memory_space<vmem>>, vector<16x16xf32>,
    return
  }
}

</mosaic_0001>

<llo_original>
// kernel: tflsgcn_cnn_forward.1
$region0: #{tflsgcn_cnn_forward.1}
  #allocation0 [shape = 'u32[]', space=smem, size = 0x4, offset = 0x4, fixed_abs, tag = 'smem constant byte address 0x4 - core index']
  #allocation1 [shape = 'u32[72,128]{1,0:T(1,128)}', space=vmem, size = 0x9000, scoped, tag = 'internal scratch']
  %s0 = inlined_call_operand.vmem [shape: f32[16,16], index: 0, kind: input, shape index: {}]
  %s1 = inlined_call_operand.vmem [shape: f32[17,32], index: 1, kind: input, shape index: {}]
  %s2 = inlined_call_operand.vmem [shape: f32[2,256], index: 2, kind: input, shape index: {}]
  %s3 = inlined_call_operand.hbm [shape: f32[264,256], index: 3, kind: input, shape index: {}]
  %s4 = inlined_call_operand.hbm [shape: f32[280,128], index: 4, kind: input, shape index: {}]
  %s5 = inlined_call_operand.hbm [shape: f32[192,96], index: 5, kind: input, shape index: {}]
  %s6 = inlined_call_operand.vmem [shape: f32[16,16], index: 6, kind: output, shape index: {}]
  %s7 = sld [smem:[#allocation0]]
  $region46: #{tflsgcn_cnn_forward.1} parent=0
    _
  %s9 = ssub.s32 1, %s7
  %s10 = scalar_select 0, %s9, %s7
  $region1: #{tflsgcn_cnn_forward.1} parent=0
    #allocation2 [shape = 'u8[270336]{0}', space=vmem, size = 0x42000, scoped, tag = 'input window, operand 3, single buffered']
    #allocation3 [shape = 's32[1]{0}', space=sflag, size = 0x4, scoped, tag = 'scoped memory for tflsgcn_cnn_forward.1']
    #allocation4 [shape = 'u8[143360]{0}', space=vmem, size = 0x23000, scoped, tag = 'input window, operand 4, single buffered']
    #allocation5 [shape = 's32[1]{0}', space=sflag, size = 0x4, scoped, tag = 'scoped memory for tflsgcn_cnn_forward.1']
    #allocation6 [shape = 'u8[98304]{0}', space=vmem, size = 0x18000, scoped, tag = 'input window, operand 5, single buffered']
    %11 = vsyncpa [#allocation3], 0
    %12 = vsyncpa [#allocation5], 0
    // Predicated region
    $region2: #{tflsgcn_cnn_forward.1} parent=1 // pred_check
      _
    $region3: #{tflsgcn_cnn_forward.1} parent=1 // pred_check_branch
      %14 = sbr.rel (0) target = $region5
    $region4: #{tflsgcn_cnn_forward.1} parent=1 // pred_region
      _
    $region5: #{tflsgcn_cnn_forward.1} parent=1 // pred_fallthru
      _
    // Predicated region
    $region6: #{tflsgcn_cnn_forward.1} parent=1 // pred_check
      _
    $region7: #{tflsgcn_cnn_forward.1} parent=1 // pred_check_branch
      %16 = sbr.rel (0) target = $region9
    $region8: #{tflsgcn_cnn_forward.1} parent=1 // pred_region
      _
    $region9: #{tflsgcn_cnn_forward.1} parent=1 // pred_fallthru
      _
    // Predicated region
    $region10: #{tflsgcn_cnn_forward.1} parent=1 // pred_check
      _
    $region11: #{tflsgcn_cnn_forward.1} parent=1 // pred_check_branch
      %18 = sbr.rel (0) target = $region13
    $region12: #{tflsgcn_cnn_forward.1} parent=1 // pred_region
      _
    $region13: #{tflsgcn_cnn_forward.1} parent=1 // pred_fallthru
      _
    // Predicated region
    $region14: #{tflsgcn_cnn_forward.1} parent=1 // pred_check
      _
    $region15: #{tflsgcn_cnn_forward.1} parent=1 // pred_check_branch
      %20 = sbr.rel (0) target = $region17
    $region16: #{tflsgcn_cnn_forward.1} parent=1 // pred_region
      %22 = vsyncadd [#allocation3], 0
      %s23 = sshll.u32 %s3, 4
      %s24 = int_to_ptr.hbm [resolvable:$true] %s23
      %s25 = sshll.u32 [#allocation2], 4
      %s26 = int_to_ptr.vmem [resolvable:$true] %s25
      %31 = dma.hbm_to_vmem [thread:$0]  %s24, 8448, %s26, [#allocation3], 256, 256, 16
    $region17: #{tflsgcn_cnn_forward.1} parent=1 // pred_fallthru
      _
    // Predicated region
    $region18: #{tflsgcn_cnn_forward.1} parent=1 // pred_check
      _
    $region19: #{tflsgcn_cnn_forward.1} parent=1 // pred_check_branch
      %33 = sbr.rel (0) target = $region21
    $region20: #{tflsgcn_cnn_forward.1} parent=1 // pred_region
      %35 = vsyncadd [#allocation5], 0
      %s36 = sshll.u32 %s4, 4
      %s37 = int_to_ptr.hbm [resolvable:$true] %s36
      %s38 = sshll.u32 [#allocation4], 4
      %s39 = int_to_ptr.vmem [resolvable:$true] %s38
      %44 = dma.hbm_to_vmem [thread:$0]  %s37, 4480, %s39, [#allocation5], 128, 128, 8
    $region21: #{tflsgcn_cnn_forward.1} parent=1 // pred_fallthru
      _
    // Predicated region
    $region22: #{tflsgcn_cnn_forward.1} parent=1 // pred_check
      _
    $region23: #{tflsgcn_cnn_forward.1} parent=1 // pred_check_branch
      %46 = sbr.rel (0) target = $region25
    $region24: #{tflsgcn_cnn_forward.1} parent=1 // pred_region
      %48 = vsyncadd [#allocation5], 0
      %s49 = sshll.u32 %s5, 4
      %s50 = int_to_ptr.hbm [resolvable:$true] %s49
      %s51 = sshll.u32 [#allocation6], 4
      %s52 = int_to_ptr.vmem [resolvable:$true] %s51
      %57 = dma.hbm_to_vmem [thread:$0]  %s50, 3072, %s52, [#allocation5], 128, 128, 8
    $region25: #{tflsgcn_cnn_forward.1} parent=1 // pred_fallthru
      _
    // Predicated region
    $region26: #{tflsgcn_cnn_forward.1} parent=1 // pred_check
      _
    $region27: #{tflsgcn_cnn_forward.1} parent=1 // pred_check_branch
      %59 = sbr.rel (0) target = $region29
    $region28: #{tflsgcn_cnn_forward.1} parent=1 // pred_region
      %61 = dma.done [#allocation3], 8448
    $region29: #{tflsgcn_cnn_forward.1} parent=1 // pred_fallthru
      _
    // Predicated region
    $region30: #{tflsgcn_cnn_forward.1} parent=1 // pred_check
      _
    $region31: #{tflsgcn_cnn_forward.1} parent=1 // pred_check_branch
      %63 = sbr.rel (0) target = $region33
    $region32: #{tflsgcn_cnn_forward.1} parent=1 // pred_region
      %65 = dma.done [#allocation5], 4480
    $region33: #{tflsgcn_cnn_forward.1} parent=1 // pred_fallthru
      _
    // Predicated region
    $region34: #{tflsgcn_cnn_forward.1} parent=1 // pred_check
      _
    $region35: #{tflsgcn_cnn_forward.1} parent=1 // pred_check_branch
      %67 = sbr.rel (0) target = $region37
    $region36: #{tflsgcn_cnn_forward.1} parent=1 // pred_region
      %69 = dma.done [#allocation5], 3072
    $region37: #{tflsgcn_cnn_forward.1} parent=1 // pred_fallthru
      _
    %v70 = vld [vmem:[%s0] sm:$0xff]
    %v71 = vld [vmem:[%s0 + $0x8] sm:$0xff]
    %vm72 = vcmask 64512
    %v74 = vsel %vm72, %v70, 0
    %v77 = vsel %vm72, %v71, 0
    %79 = vmatpush.xpose.msra.mxu0 0.0
    %80 = vmatpush.xpose.msra.mxu0 0.0
    %81 = vmatpush.xpose.msra.mxu0 0.0
    %82 = vmatpush.xpose.msra.mxu0 0.0
    %83 = vmatpush.xpose.msra.mxu0 0.0
    %84 = vmatpush.xpose.msra.mxu0 0.0
    %85 = vmatpush.xpose.msra.mxu0 0.0
    %86 = vmatpush.xpose.msra.mxu0 0.0
    %87 = vmatpush.xpose.msra.mxu0 0.0
    %88 = vmatpush.xpose.msra.mxu0 0.0
    %89 = vmatpush.xpose.msra.mxu0 0.0
    %90 = vmatpush.xpose.msra.mxu0 0.0
    %91 = vmatpush.xpose.msra.mxu0 0.0
    %92 = vmatpush.xpose.msra.mxu0 0.0
    %93 = vmatpush.xpose.msra.mxu0 %v77
    %94 = vmatpush.xpose.msra.mxu0 %v74
    %95 = vmatmul.f32.gmra.mxu0 %v74
    %v96 = vpop.f32.mrf.mxu0
    %v97 = vadd.f32 0.0, %v96
    %98 = vmatmul.f32.gmra.mxu0 %v77
    %v99 = vpop.f32.mrf.mxu0
    %v100 = vadd.f32 0.0, %v99
    %101 = vdwg.mxu0
    %v102 = vmax.f32 %v97, 0.0
    %v103 = vmax.f32 %v100, 0.0
    %vm104 = vcmask 130048
    %v105 = vsel %vm104, %v102, -inf
    %106 = vmax.xlane.f32.xlu0 %v105
    %v107 = vpop.xlane.xlu0 %106
    %v108 = vsel %vm104, %v103, -inf
    %109 = vmax.xlane.f32.xlu0 %v108
    %v110 = vpop.xlane.xlu0 %109
    %v111 = vsub.f32 %v102, %v107
    %v112 = vsub.f32 %v103, %v110
    %v113 = vmul.f32 %v111, 1.442695
    %v114 = vpow.pop %v113
    %v115 = vmul.f32 %v112, 1.442695
    %v116 = vpow.pop %v115
    %v117 = vsel %vm104, %v114, 0.0
    %118 = vadd.xlane.f32.xlu0 %v117
    %v119 = vpop.xlane.xlu0 %118
    %v120 = vsel %vm104, %v116, 0.0
    %121 = vadd.xlane.f32.xlu0 %v120
    %v122 = vpop.xlane.xlu0 %121
    %v123 = vrcp.pop %v119
    %v124 = vmul.f32 %v119, %v123
    %v125 = vsub.f32 1.0, %v124
    %v126 = vmul.f32 %v123, %v125
    %v127 = vadd.f32 %v123, %v126
    %vm128 = vweird.f32 %v119
    %vm129 = vweird.f32 %v123
    %vm130 = vmor %vm128, %vm129
    %v131 = vsel %vm130, %v123, %v127
    %v132 = vand.u32 2147483647, %v119
    %vm133 = vcmp.eq.f32.partialorder %v132, 8.507059e+37
    %v134 = vand.u32 %v119, 2147483648
    %v135 = vor.u32 1.1754944e-38, %v134
    %v136 = vsel %vm133, %v135, %v131
    %v137 = vrcp.pop %v122
    %v138 = vmul.f32 %v122, %v137
    %v139 = vsub.f32 1.0, %v138
    %v140 = vmul.f32 %v137, %v139
    %v141 = vadd.f32 %v137, %v140
    %vm142 = vweird.f32 %v122
    %vm143 = vweird.f32 %v137
    %vm144 = vmor %vm142, %vm143
    %v145 = vsel %vm144, %v137, %v141
    %v146 = vand.u32 2147483647, %v122
    %vm147 = vcmp.eq.f32.partialorder %v146, 8.507059e+37
    %v148 = vand.u32 %v122, 2147483648
    %v149 = vor.u32 1.1754944e-38, %v148
    %v150 = vsel %vm147, %v149, %v145
    %v151 = vmul.f32 %v114, %v136
    %v152 = vmul.f32 %v116, %v150
    %v153 = vld [vmem:[#allocation6] sm:$0xff]
    %154 = vmatpush.msra.mxu0 0.0
    %155 = vmatpush.msra.mxu0 0.0
    %156 = vmatpush.msra.mxu0 0.0
    %157 = vmatpush.msra.mxu0 0.0
    %158 = vmatpush.msra.mxu0 0.0
    %159 = vmatpush.msra.mxu0 0.0
    %160 = vmatpush.msra.mxu0 0.0
    %161 = vmatpush.msra.mxu0 0.0
    %162 = vmatpush.msra.mxu0 0.0
    %163 = vmatpush.msra.mxu0 0.0
    %164 = vmatpush.msra.mxu0 0.0
    %165 = vmatpush.msra.mxu0 0.0
    %166 = vmatpush.msra.mxu0 0.0
    %167 = vmatpush.msra.mxu0 0.0
    %168 = vmatpush.msra.mxu0 0.0
    %169 = vmatpush.msra.mxu0 %v153
    %170 = vmatmul.f32.gmra.mxu0 %v74
    %v171 = vpop.f32.mrf.mxu0
    %v172 = vadd.f32 0.0, %v171
    %173 = vmatmul.f32.gmra.mxu0 %v77
    %v174 = vpop.f32.mrf.mxu0
    %v175 = vadd.f32 0.0, %v174
    %176 = vdwg.mxu0
    %v177 = vld [vmem:[#allocation6 + $0x80] sm:$0xff]
    %178 = vmatpush.msra.mxu0 0.0
    %179 = vmatpush.msra.mxu0 0.0
    %180 = vmatpush.msra.mxu0 0.0
    %181 = vmatpush.msra.mxu0 0.0
    %182 = vmatpush.msra.mxu0 0.0
    %183 = vmatpush.msra.mxu0 0.0
    %184 = vmatpush.msra.mxu0 0.0
    %185 = vmatpush.msra.mxu0 0.0
    %186 = vmatpush.msra.mxu0 0.0
    %187 = vmatpush.msra.mxu0 0.0
    %188 = vmatpush.msra.mxu0 0.0
    %189 = vmatpush.msra.mxu0 0.0
    %190 = vmatpush.msra.mxu0 0.0
    %191 = vmatpush.msra.mxu0 0.0
    %192 = vmatpush.msra.mxu0 0.0
    %193 = vmatpush.msra.mxu0 %v177
    %194 = vmatmul.f32.gmra.mxu0 %v74
    %v195 = vpop.f32.mrf.mxu0
    %v196 = vadd.f32 0.0, %v195
    %197 = vmatmul.f32.gmra.mxu0 %v77
    %v198 = vpop.f32.mrf.mxu0
    %v199 = vadd.f32 0.0, %v198
    %200 = vdwg.mxu0
    %v201 = vld [vmem:[#allocation6 + $0x88] sm:$0xff]
    %202 = vmatpush.msra.mxu0 0.0
    %203 = vmatpush.msra.mxu0 0.0
    %204 = vmatpush.msra.mxu0 0.0
    %205 = vmatpush.msra.mxu0 0.0
    %206 = vmatpush.msra.mxu0 0.0
    %207 = vmatpush.msra.mxu0 0.0
    %208 = vmatpush.msra.mxu0 0.0
    %209 = vmatpush.msra.mxu0 0.0
    %210 = vmatpush.msra.mxu0 0.0
    %211 = vmatpush.msra.mxu0 0.0
    %212 = vmatpush.msra.mxu0 0.0
    %213 = vmatpush.msra.mxu0 0.0
    %214 = vmatpush.msra.mxu0 0.0
    %215 = vmatpush.msra.mxu0 0.0
    %216 = vmatpush.msra.mxu0 0.0
    %217 = vmatpush.msra.mxu0 %v201
    %218 = vmatmul.f32.gmra.mxu0 %v74
    %v219 = vpop.f32.mrf.mxu0
    %v220 = vadd.f32 0.0, %v219
    %221 = vmatmul.f32.gmra.mxu0 %v77
    %v222 = vpop.f32.mrf.mxu0
    %v223 = vadd.f32 0.0, %v222
    %224 = vdwg.mxu0
    %225 = vrot.lane.b32.xlu0 %v70, 120
    %v226 = vpop.permute.xlu0 %225
    %227 = vrot.lane.b32.xlu0 %v71, 120
    %v228 = vpop.permute.xlu0 %227
    %v232 = vsel %vm104, %v151, 0
    %v235 = vsel %vm104, %v152, 0
    %237 = vmatpush.msra.mxu0 0.0
    %238 = vmatpush.msra.mxu0 0.0
    %239 = vmatpush.msra.mxu0 0.0
    %240 = vmatpush.msra.mxu0 0.0
    %241 = vmatpush.msra.mxu0 0.0
    %242 = vmatpush.msra.mxu0 0.0
    %243 = vmatpush.msra.mxu0 0.0
    %244 = vmatpush.msra.mxu0 0.0
    %245 = vmatpush.msra.mxu0 0.0
    %246 = vmatpush.msra.mxu0 0.0
    %247 = vmatpush.msra.mxu0 0.0
    %248 = vmatpush.msra.mxu0 0.0
    %249 = vmatpush.msra.mxu0 0.0
    %250 = vmatpush.msra.mxu0 0.0
    %251 = vmatpush.msra.mxu0 %v228
    %252 = vmatpush.msra.mxu0 %v226
    %253 = vmatmul.f32.gmra.mxu0 %v232
    %v254 = vpop.f32.mrf.mxu0
    %v255 = vadd.f32 0.0, %v254
    %256 = vmatmul.f32.gmra.mxu0 %v235
    %v257 = vpop.f32.mrf.mxu0
    %v258 = vadd.f32 0.0, %v257
    %259 = vdwg.mxu0
    %260 = vmatpush.msra.mxu0 0.0
    %261 = vmatpush.msra.mxu0 0.0
    %262 = vmatpush.msra.mxu0 0.0
    %263 = vmatpush.msra.mxu0 0.0
    %264 = vmatpush.msra.mxu0 0.0
    %265 = vmatpush.msra.mxu0 0.0
    %266 = vmatpush.msra.mxu0 0.0
    %267 = vmatpush.msra.mxu0 0.0
    %268 = vmatpush.msra.mxu0 0.0
    %269 = vmatpush.msra.mxu0 0.0
    %270 = vmatpush.msra.mxu0 0.0
    %271 = vmatpush.msra.mxu0 0.0
    %272 = vmatpush.msra.mxu0 0.0
    %273 = vmatpush.msra.mxu0 0.0
    %274 = vmatpush.msra.mxu0 %v258
    %275 = vmatpush.msra.mxu0 %v255
    %276 = vmatmul.f32.gmra.mxu0 %v232
    %v277 = vpop.f32.mrf.mxu0
    %v278 = vadd.f32 0.0, %v277
    %279 = vmatmul.f32.gmra.mxu0 %v235
    %v280 = vpop.f32.mrf.mxu0
    %v281 = vadd.f32 0.0, %v280
    %282 = vdwg.mxu0
    %285 = vrot.lane.b32.xlu0 %v255, 8
    %v286 = vpop.permute.xlu0 %285
    %287 = vrot.lane.b32.xlu0 %v258, 8
    %v288 = vpop.permute.xlu0 %287
    %293 = vrot.lane.b32.xlu0 %v278, 16
    %v294 = vpop.permute.xlu0 %293
    %295 = vrot.lane.b32.xlu0 %v281, 16
    %v296 = vpop.permute.xlu0 %295
    %v299 = vsel %vm72, %v226, %v286
    %v300 = vsel %vm72, %v228, %v288
    %v301 = vsel %vm104, %v299, %v294
    %v302 = vsel %vm104, %v300, %v296
    %v303 = vld [vmem:[#allocation6 + $0x8] sm:$0xff]
    %v304 = vld [vmem:[#allocation6 + $0x10] sm:$0xff]
    %v305 = vld [vmem:[#allocation6 + $0x18] sm:$0xff]
    %vm306 = vcmask 195584
    %v308 = vsel %vm306, %v301, 0
    %v311 = vsel %vm306, %v302, 0
    %313 = vmatpush.msra.mxu0 0.0
    %314 = vmatpush.msra.mxu0 0.0
    %315 = vmatpush.msra.mxu0 0.0
    %316 = vmatpush.msra.mxu0 0.0
    %317 = vmatpush.msra.mxu0 0.0
    %318 = vmatpush.msra.mxu0 0.0
    %319 = vmatpush.msra.mxu0 0.0
    %320 = vmatpush.msra.mxu0 0.0
    %321 = vmatpush.msra.mxu0 0.0
    %322 = vmatpush.msra.mxu0 0.0
    %323 = vmatpush.msra.mxu0 0.0
    %324 = vmatpush.msra.mxu0 0.0
    %325 = vmatpush.msra.mxu0 0.0
    %326 = vmatpush.msra.mxu0 %v305
    %327 = vmatpush.msra.mxu0 %v304
    %328 = vmatpush.msra.mxu0 %v303
    %329 = vmatmul.f32.gmra.mxu0 %v308
    %v330 = vpop.f32.mrf.mxu0
    %v331 = vadd.f32 0.0, %v330
    %332 = vmatmul.f32.gmra.mxu0 %v311
    %v333 = vpop.f32.mrf.mxu0
    %v334 = vadd.f32 0.0, %v333
    %335 = vdwg.mxu0
    %v336 = vmul.f32 %v331, %v172
    %v337 = vmul.f32 %v334, %v175
    %v338 = vld [vmem:[#allocation6 + $0x20] sm:$0xff]
    %v339 = vld [vmem:[#allocation6 + $0x28] sm:$0xff]
    %v340 = vld [vmem:[#allocation6 + $0x30] sm:$0xff]
    %v341 = vld [vmem:[#allocation6 + $0x38] sm:$0xff]
    %v342 = vld [vmem:[#allocation6 + $0x40] sm:$0xff]
    %v343 = vld [vmem:[#allocation6 + $0x48] sm:$0xff]
    %v344 = vld [vmem:[#allocation6 + $0x50] sm:$0xff]
    %v345 = vld [vmem:[#allocation6 + $0x58] sm:$0xff]
    %v346 = vld [vmem:[#allocation6 + $0x60] sm:$0xff]
    %v347 = vld [vmem:[#allocation6 + $0x68] sm:$0xff]
    %v348 = vld [vmem:[#allocation6 + $0x70] sm:$0xff]
    %v349 = vld [vmem:[#allocation6 + $0x78] sm:$0xff]
    %v350 = vld [vmem:[%s1] sm:$0xff]
    %v351 = vld [vmem:[%s1 + $0x8] sm:$0xff]
    %v352 = vld [vmem:[%s1 + $0x10] sm:$0x1]
    %v353 = vperm.slane %v352, 0
    %v354 = vmul.f32 %v350, %v353
    %v355 = vmul.f32 %v351, %v353
    %v356 = vld [vmem:[#allocation6 + $0x90] sm:$0xff]
    %v357 = vld [vmem:[#allocation6 + $0x98] sm:$0xff]
    %v358 = vld [vmem:[#allocation6 + $0xa0] sm:$0xff]
    %v359 = vld [vmem:[#allocation6 + $0xa8] sm:$0xff]
    %vm360 = vcmask 261120
    %v362 = vsel %vm360, %v354, 0
    %v365 = vsel %vm360, %v355, 0
    %367 = vmatpush.msra.mxu0 0.0
    %368 = vmatpush.msra.mxu0 0.0
    %369 = vmatpush.msra.mxu0 0.0
    %370 = vmatpush.msra.mxu0 0.0
    %371 = vmatpush.msra.mxu0 0.0
    %372 = vmatpush.msra.mxu0 0.0
    %373 = vmatpush.msra.mxu0 0.0
    %374 = vmatpush.msra.mxu0 0.0
    %375 = vmatpush.msra.mxu0 0.0
    %376 = vmatpush.msra.mxu0 0.0
    %377 = vmatpush.msra.mxu0 0.0
    %378 = vmatpush.msra.mxu0 0.0
    %379 = vmatpush.msra.mxu0 %v359
    %380 = vmatpush.msra.mxu0 %v358
    %381 = vmatpush.msra.mxu0 %v357
    %382 = vmatpush.msra.mxu0 %v356
    %383 = vmatmul.f32.gmra.mxu0 %v362
    %v384 = vpop.f32.mrf.mxu0
    %v385 = vadd.f32 0.0, %v384
    %386 = vmatmul.f32.gmra.mxu0 %v365
    %v387 = vpop.f32.mrf.mxu0
    %v388 = vadd.f32 0.0, %v387
    %389 = vdwg.mxu0
    %v390 = vmul.f32 %v385, %v196
    %v391 = vmul.f32 %v388, %v199
    %v392 = vld [vmem:[#allocation6 + $0xb0] sm:$0xff]
    %v393 = vld [vmem:[#allocation6 + $0xb8] sm:$0xff]
    %v395 = vsel %vm104, %v390, 0
    %v398 = vsel %vm104, %v391, 0
    %400 = vmatpush.msra.mxu0 0.0
    %401 = vmatpush.msra.mxu0 0.0
    %402 = vmatpush.msra.mxu0 0.0
    %403 = vmatpush.msra.mxu0 0.0
    %404 = vmatpush.msra.mxu0 0.0
    %405 = vmatpush.msra.mxu0 0.0
    %406 = vmatpush.msra.mxu0 0.0
    %407 = vmatpush.msra.mxu0 0.0
    %408 = vmatpush.msra.mxu0 0.0
    %409 = vmatpush.msra.mxu0 0.0
    %410 = vmatpush.msra.mxu0 0.0
    %411 = vmatpush.msra.mxu0 0.0
    %412 = vmatpush.msra.mxu0 0.0
    %413 = vmatpush.msra.mxu0 0.0
    %414 = vmatpush.msra.mxu0 %v393
    %415 = vmatpush.msra.mxu0 %v392
    %416 = vmatmul.f32.gmra.mxu0 %v395
    %v417 = vpop.f32.mrf.mxu0
    %v418 = vadd.f32 0.0, %v417
    %419 = vmatmul.f32.gmra.mxu0 %v398
    %v420 = vpop.f32.mrf.mxu0
    %v421 = vadd.f32 0.0, %v420
    %422 = vdwg.mxu0
    %v423 = vld [vmem:[#allocation2] sm:$0xff]
    %v424 = vld [vmem:[#allocation2 + $0x8] sm:$0xff]
    %v425 = vld [vmem:[#allocation2 + $0x10] sm:$0xff]
    %v426 = vld [vmem:[#allocation2 + $0x18] sm:$0xff]
    %v427 = vld [vmem:[#allocation2 + $0x20] sm:$0xff]
    %v428 = vld [vmem:[#allocation2 + $0x28] sm:$0xff]
    %v429 = vld [vmem:[#allocation2 + $0x30] sm:$0xff]
    %v430 = vld [vmem:[#allocation2 + $0x38] sm:$0xff]
    %v431 = vld [vmem:[#allocation2 + $0x40] sm:$0xff]
    %v432 = vld [vmem:[#allocation2 + $0x48] sm:$0xff]
    %v433 = vld [vmem:[#allocation2 + $0x50] sm:$0xff]
    %v434 = vld [vmem:[#allocation2 + $0x58] sm:$0xff]
    %v435 = vld [vmem:[#allocation2 + $0x60] sm:$0xff]
    %v436 = vld [vmem:[#allocation2 + $0x68] sm:$0xff]
    %v437 = vld [vmem:[#allocation2 + $0x70] sm:$0xff]
    %v438 = vld [vmem:[#allocation2 + $0x78] sm:$0xff]
    %v439 = vld [vmem:[#allocation2 + $0x80] sm:$0xff]
    %v440 = vld [vmem:[#allocation2 + $0x88] sm:$0xff]
    %v441 = vld [vmem:[#allocation2 + $0x90] sm:$0xff]
    %v442 = vld [vmem:[#allocation2 + $0x98] sm:$0xff]
    %v443 = vld [vmem:[#allocation2 + $0xa0] sm:$0xff]
    %v444 = vld [vmem:[#allocation2 + $0xa8] sm:$0xff]
    %v445 = vld [vmem:[#allocation2 + $0xb0] sm:$0xff]
    %v446 = vld [vmem:[#allocation2 + $0xb8] sm:$0xff]
    %v447 = vld [vmem:[#allocation2 + $0xc0] sm:$0xff]
    %v448 = vld [vmem:[#allocation2 + $0xc8] sm:$0xff]
    %v449 = vld [vmem:[#allocation2 + $0xd0] sm:$0xff]
    %v450 = vld [vmem:[#allocation2 + $0xd8] sm:$0xff]
    %v451 = vld [vmem:[#allocation2 + $0xe0] sm:$0xff]
    %v452 = vld [vmem:[#allocation2 + $0xe8] sm:$0xff]
    %v453 = vld [vmem:[#allocation2 + $0xf0] sm:$0xff]
    %v454 = vld [vmem:[#allocation2 + $0xf8] sm:$0xff]
    %v455 = vld [vmem:[#allocation2 + $0x100] sm:$0xff]
    %v456 = vld [vmem:[#allocation2 + $0x108] sm:$0xff]
    %v457 = vld [vmem:[#allocation2 + $0x110] sm:$0xff]
    %v458 = vld [vmem:[#allocation2 + $0x118] sm:$0xff]
    %v459 = vld [vmem:[#allocation2 + $0x120] sm:$0xff]
    %v460 = vld [vmem:[#allocation2 + $0x128] sm:$0xff]
    %v461 = vld [vmem:[#allocation2 + $0x130] sm:$0xff]
    %v462 = vld [vmem:[#allocation2 + $0x138] sm:$0xff]
    %v463 = vld [vmem:[#allocation2 + $0x140] sm:$0xff]
    %v464 = vld [vmem:[#allocation2 + $0x148] sm:$0xff]
    %v465 = vld [vmem:[#allocation2 + $0x150] sm:$0xff]
    %v466 = vld [vmem:[#allocation2 + $0x158] sm:$0xff]
    %v467 = vld [vmem:[#allocation2 + $0x160] sm:$0xff]
    %v468 = vld [vmem:[#allocation2 + $0x168] sm:$0xff]
    %v469 = vld [vmem:[#allocation2 + $0x170] sm:$0xff]
    %v470 = vld [vmem:[#allocation2 + $0x178] sm:$0xff]
    %v471 = vld [vmem:[#allocation2 + $0x180] sm:$0xff]
    %v472 = vld [vmem:[#allocation2 + $0x188] sm:$0xff]
    %v473 = vld [vmem:[#allocation2 + $0x190] sm:$0xff]
    %v474 = vld [vmem:[#allocation2 + $0x198] sm:$0xff]
    %v475 = vld [vmem:[#allocation2 + $0x1a0] sm:$0xff]
    %v476 = vld [vmem:[#allocation2 + $0x1a8] sm:$0xff]
    %v477 = vld [vmem:[#allocation2 + $0x1b0] sm:$0xff]
    %v478 = vld [vmem:[#allocation2 + $0x1b8] sm:$0xff]
    %v479 = vld [vmem:[#allocation2 + $0x1c0] sm:$0xff]
    %v480 = vld [vmem:[#allocation2 + $0x1c8] sm:$0xff]
    %v481 = vld [vmem:[#allocation2 + $0x1d0] sm:$0xff]
    %v482 = vld [vmem:[#allocation2 + $0x1d8] sm:$0xff]
    %v483 = vld [vmem:[#allocation2 + $0x1e0] sm:$0xff]
    %v484 = vld [vmem:[#allocation2 + $0x1e8] sm:$0xff]
    %v485 = vld [vmem:[#allocation2 + $0x1f0] sm:$0xff]
    %v486 = vld [vmem:[#allocation2 + $0x1f8] sm:$0xff]
    %s487 = scalar_lea.vmem [#allocation2], 512
    %v488 = vld [vmem:[%s487] ss:$8 sm:$0x3]
    %v489 = vld [vmem:[%s2] sm:$0xf]
    %v491 = vperm.slane %v488, 0
    %v492 = vperm.slane %v488, 1
    %496 = vst [vmem:[#allocation1] ss:$4 sm:$0xff] %v489
    %v497 = vld.sshfl [vmem:[#allocation1] sm:$0xff pattern:$0x73625140]
    %v498 = vld.sshfl [vmem:[#allocation1 + $0x8] sm:$0xff pattern:$0x73625140]
    %501 = vmatpush.msra.mxu0 %v453
    %502 = vmatpush.msra.mxu0 %v451
    %503 = vmatpush.msra.mxu0 %v449
    %504 = vmatpush.msra.mxu0 %v447
    %505 = vmatpush.msra.mxu0 %v445
    %506 = vmatpush.msra.mxu0 %v443
    %507 = vmatpush.msra.mxu0 %v441
    %508 = vmatpush.msra.mxu0 %v439
    %509 = vmatpush.msra.mxu0 %v437
    %510 = vmatpush.msra.mxu0 %v435
    %511 = vmatpush.msra.mxu0 %v433
    %512 = vmatpush.msra.mxu0 %v431
    %513 = vmatpush.msra.mxu0 %v429
    %514 = vmatpush.msra.mxu0 %v427
    %515 = vmatpush.msra.mxu0 %v425
    %516 = vmatpush.msra.mxu0 %v423
    %517 = vmatmul.f32.gmra.mxu0 %v497
    %v518 = vpop.f32.mrf.mxu0
    %v519 = vadd.f32 %v491, %v518
    %520 = vdwg.mxu0
    %521 = vmatpush.msra.mxu0 %v485
    %522 = vmatpush.msra.mxu0 %v483
    %523 = vmatpush.msra.mxu0 %v481
    %524 = vmatpush.msra.mxu0 %v479
    %525 = vmatpush.msra.mxu0 %v477
    %526 = vmatpush.msra.mxu0 %v475
    %527 = vmatpush.msra.mxu0 %v473
    %528 = vmatpush.msra.mxu0 %v471
    %529 = vmatpush.msra.mxu0 %v469
    %530 = vmatpush.msra.mxu0 %v467
    %531 = vmatpush.msra.mxu0 %v465
    %532 = vmatpush.msra.mxu0 %v463
    %533 = vmatpush.msra.mxu0 %v461
    %534 = vmatpush.msra.mxu0 %v459
    %535 = vmatpush.msra.mxu0 %v457
    %536 = vmatpush.msra.mxu0 %v455
    %537 = vmatmul.f32.gmra.mxu0 %v498
    %v538 = vpop.f32.mrf.mxu0
    %v539 = vadd.f32 %v519, %v538
    %540 = vdwg.mxu0
    %541 = vmatpush.msra.mxu0 %v454
    %542 = vmatpush.msra.mxu0 %v452
    %543 = vmatpush.msra.mxu0 %v450
    %544 = vmatpush.msra.mxu0 %v448
    %545 = vmatpush.msra.mxu0 %v446
    %546 = vmatpush.msra.mxu0 %v444
    %547 = vmatpush.msra.mxu0 %v442
    %548 = vmatpush.msra.mxu0 %v440
    %549 = vmatpush.msra.mxu0 %v438
    %550 = vmatpush.msra.mxu0 %v436
    %551 = vmatpush.msra.mxu0 %v434
    %552 = vmatpush.msra.mxu0 %v432
    %553 = vmatpush.msra.mxu0 %v430
    %554 = vmatpush.msra.mxu0 %v428
    %555 = vmatpush.msra.mxu0 %v426
    %556 = vmatpush.msra.mxu0 %v424
    %557 = vmatmul.f32.gmra.mxu0 %v497
    %v558 = vpop.f32.mrf.mxu0
    %v559 = vadd.f32 %v492, %v558
    %560 = vdwg.mxu0
    %561 = vmatpush.msra.mxu0 %v486
    %562 = vmatpush.msra.mxu0 %v484
    %563 = vmatpush.msra.mxu0 %v482
    %564 = vmatpush.msra.mxu0 %v480
    %565 = vmatpush.msra.mxu0 %v478
    %566 = vmatpush.msra.mxu0 %v476
    %567 = vmatpush.msra.mxu0 %v474
    %568 = vmatpush.msra.mxu0 %v472
    %569 = vmatpush.msra.mxu0 %v470
    %570 = vmatpush.msra.mxu0 %v468
    %571 = vmatpush.msra.mxu0 %v466
    %572 = vmatpush.msra.mxu0 %v464
    %573 = vmatpush.msra.mxu0 %v462
    %574 = vmatpush.msra.mxu0 %v460
    %575 = vmatpush.msra.mxu0 %v458
    %576 = vmatpush.msra.mxu0 %v456
    %577 = vmatmul.f32.gmra.mxu0 %v498
    %v578 = vpop.f32.mrf.mxu0
    %v579 = vadd.f32 %v559, %v578
    %580 = vdwg.mxu0
    %v581 = vmax.f32 %v539, 0.0
    %v582 = vmax.f32 %v579, 0.0
    %v583 = vld [vmem:[#allocation4] sm:$0xff]
    %v584 = vld [vmem:[#allocation4 + $0x8] sm:$0xff]
    %v585 = vld [vmem:[#allocation4 + $0x10] sm:$0xff]
    %v586 = vld [vmem:[#allocation4 + $0x18] sm:$0xff]
    %v587 = vld [vmem:[#allocation4 + $0x20] sm:$0xff]
    %v588 = vld [vmem:[#allocation4 + $0x28] sm:$0xff]
    %v589 = vld [vmem:[#allocation4 + $0x30] sm:$0xff]
    %v590 = vld [vmem:[#allocation4 + $0x38] sm:$0xff]
    %v591 = vld [vmem:[#allocation4 + $0x40] sm:$0xff]
    %v592 = vld [vmem:[#allocation4 + $0x48] sm:$0xff]
    %v593 = vld [vmem:[#allocation4 + $0x50] sm:$0xff]
    %v594 = vld [vmem:[#allocation4 + $0x58] sm:$0xff]
    %v595 = vld [vmem:[#allocation4 + $0x60] sm:$0xff]
    %v596 = vld [vmem:[#allocation4 + $0x68] sm:$0xff]
    %v597 = vld [vmem:[#allocation4 + $0x70] sm:$0xff]
    %v598 = vld [vmem:[#allocation4 + $0x78] sm:$0xff]
    %v599 = vld [vmem:[#allocation4 + $0x80] sm:$0xff]
    %v600 = vld [vmem:[#allocation4 + $0x88] sm:$0xff]
    %v601 = vld [vmem:[#allocation4 + $0x90] sm:$0xff]
    %v602 = vld [vmem:[#allocation4 + $0x98] sm:$0xff]
    %v603 = vld [vmem:[#allocation4 + $0xa0] sm:$0xff]
    %v604 = vld [vmem:[#allocation4 + $0xa8] sm:$0xff]
    %v605 = vld [vmem:[#allocation4 + $0xb0] sm:$0xff]
    %v606 = vld [vmem:[#allocation4 + $0xb8] sm:$0xff]
    %v607 = vld [vmem:[#allocation4 + $0xc0] sm:$0xff]
    %v608 = vld [vmem:[#allocation4 + $0xc8] sm:$0xff]
    %v609 = vld [vmem:[#allocation4 + $0xd0] sm:$0xff]
    %v610 = vld [vmem:[#allocation4 + $0xd8] sm:$0xff]
    %v611 = vld [vmem:[#allocation4 + $0xe0] sm:$0xff]
    %v612 = vld [vmem:[#allocation4 + $0xe8] sm:$0xff]
    %v613 = vld [vmem:[#allocation4 + $0xf0] sm:$0xff]
    %v614 = vld [vmem:[#allocation4 + $0xf8] sm:$0xff]
    %v615 = vld [vmem:[#allocation4 + $0x100] sm:$0x1]
    %v616 = vld [vmem:[#allocation4 + $0x108] sm:$0xf]
    %v617 = vld [vmem:[#allocation4 + $0x110] sm:$0x1]
    %v618 = vperm.slane %v615, 0
    %619 = vmatpush.msra.mxu0 %v598
    %620 = vmatpush.msra.mxu0 %v597
    %621 = vmatpush.msra.mxu0 %v596
    %622 = vmatpush.msra.mxu0 %v595
    %623 = vmatpush.msra.mxu0 %v594
    %624 = vmatpush.msra.mxu0 %v593
    %625 = vmatpush.msra.mxu0 %v592
    %626 = vmatpush.msra.mxu0 %v591
    %627 = vmatpush.msra.mxu0 %v590
    %628 = vmatpush.msra.mxu0 %v589
    %629 = vmatpush.msra.mxu0 %v588
    %630 = vmatpush.msra.mxu0 %v587
    %631 = vmatpush.msra.mxu0 %v586
    %632 = vmatpush.msra.mxu0 %v585
    %633 = vmatpush.msra.mxu0 %v584
    %634 = vmatpush.msra.mxu0 %v583
    %635 = vmatmul.f32.gmra.mxu0 %v581
    %v636 = vpop.f32.mrf.mxu0
    %v637 = vadd.f32 %v618, %v636
    %638 = vdwg.mxu0
    %639 = vmatpush.msra.mxu0 %v614
    %640 = vmatpush.msra.mxu0 %v613
    %641 = vmatpush.msra.mxu0 %v612
    %642 = vmatpush.msra.mxu0 %v611
    %643 = vmatpush.msra.mxu0 %v610
    %644 = vmatpush.msra.mxu0 %v609
    %645 = vmatpush.msra.mxu0 %v608
    %646 = vmatpush.msra.mxu0 %v607
    %647 = vmatpush.msra.mxu0 %v606
    %648 = vmatpush.msra.mxu0 %v605
    %649 = vmatpush.msra.mxu0 %v604
    %650 = vmatpush.msra.mxu0 %v603
    %651 = vmatpush.msra.mxu0 %v602
    %652 = vmatpush.msra.mxu0 %v601
    %653 = vmatpush.msra.mxu0 %v600
    %654 = vmatpush.msra.mxu0 %v599
    %655 = vmatmul.f32.gmra.mxu0 %v582
    %v656 = vpop.f32.mrf.mxu0
    %v657 = vadd.f32 %v637, %v656
    %658 = vdwg.mxu0
    %v659 = vmax.f32 %v657, 0.0
    %v660 = vperm.slane %v617, 0
    %661 = vmatpush.xpose.msra.mxu0 0.0
    %662 = vmatpush.xpose.msra.mxu0 0.0
    %663 = vmatpush.xpose.msra.mxu0 0.0
    %664 = vmatpush.xpose.msra.mxu0 0.0
    %665 = vmatpush.xpose.msra.mxu0 0.0
    %666 = vmatpush.xpose.msra.mxu0 0.0
    %667 = vmatpush.xpose.msra.mxu0 0.0
    %668 = vmatpush.xpose.msra.mxu0 0.0
    %669 = vmatpush.xpose.msra.mxu0 0.0
    %670 = vmatpush.xpose.msra.mxu0 0.0
    %671 = vmatpush.xpose.msra.mxu0 0.0
    %672 = vmatpush.xpose.msra.mxu0 0.0
    %673 = vmatpush.xpose.msra.mxu0 0.0
    %674 = vmatpush.xpose.msra.mxu0 0.0
    %675 = vmatpush.xpose.msra.mxu0 0.0
    %676 = vmatpush.xpose.msra.mxu0 %v616
    %677 = vmatmul.f32.gmra.mxu0 %v659
    %v678 = vpop.f32.mrf.mxu0
    %v679 = vadd.f32 %v660, %v678
    %680 = vdwg.mxu0
    %682 = vrot.lane.b32.xlu0 %v679, 4
    %v683 = vpop.permute.xlu0 %682
    %v685 = vrot.slane %v679, 1
    %686 = vrot.lane.b32.xlu0 %v685, 8
    %v687 = vpop.permute.xlu0 %686
    %689 = vrot.lane.b32.xlu0 %v685, 12
    %v690 = vpop.permute.xlu0 %689
    %vm692 = vcmask 31744
    %v693 = vsel %vm692, %v679, %v683
    %v694 = vsel %vm72, %v693, %v687
    %vm695 = vcmask 97280
    %v696 = vsel %vm695, %v694, %v690
    %vm697 = vcmask 785408
    %v699 = vsel %vm697, %v336, 0
    %v702 = vsel %vm697, %v337, 0
    %704 = vmatpush.msra.mxu0 0.0
    %705 = vmatpush.msra.mxu0 0.0
    %706 = vmatpush.msra.mxu0 0.0
    %707 = vmatpush.msra.mxu0 0.0
    %708 = vmatpush.msra.mxu0 %v349
    %709 = vmatpush.msra.mxu0 %v348
    %710 = vmatpush.msra.mxu0 %v347
    %711 = vmatpush.msra.mxu0 %v346
    %712 = vmatpush.msra.mxu0 %v345
    %713 = vmatpush.msra.mxu0 %v344
    %714 = vmatpush.msra.mxu0 %v343
    %715 = vmatpush.msra.mxu0 %v342
    %716 = vmatpush.msra.mxu0 %v341
    %717 = vmatpush.msra.mxu0 %v340
    %718 = vmatpush.msra.mxu0 %v339
    %719 = vmatpush.msra.mxu0 %v338
    %720 = vmatmul.f32.gmra.mxu0 %v699
    %v721 = vpop.f32.mrf.mxu0
    %v722 = vadd.f32 %v418, %v721
    %723 = vmatmul.f32.gmra.mxu0 %v702
    %v724 = vpop.f32.mrf.mxu0
    %v725 = vadd.f32 %v421, %v724
    %726 = vdwg.mxu0
    %v727 = vperm.slane %v696, 0
    %v728 = vmul.f32 %v722, %v727
    %v729 = vmul.f32 %v725, %v727
    %v730 = vadd.f32 %v728, %v220
    %v731 = vadd.f32 %v729, %v223
    %732 = vst.msk [vmem:[%s6] sm:$0xff] %vm104, %v730
    %733 = vst.msk [vmem:[%s6 + $0x8] sm:$0xff] %vm104, %v731
    // Predicated region
    $region38: #{tflsgcn_cnn_forward.1} parent=1 // pred_check
      _
    $region39: #{tflsgcn_cnn_forward.1} parent=1 // pred_check_branch
      %735 = sbr.rel (0) target = $region41
    $region40: #{tflsgcn_cnn_forward.1} parent=1 // pred_region
      _
    $region41: #{tflsgcn_cnn_forward.1} parent=1 // pred_fallthru
      _
    // Predicated region
    $region42: #{tflsgcn_cnn_forward.1} parent=1 // pred_check
      _
    $region43: #{tflsgcn_cnn_forward.1} parent=1 // pred_check_branch
      %737 = sbr.rel (0) target = $region45
    $region44: #{tflsgcn_cnn_forward.1} parent=1 // pred_region
      _
    $region45: #{tflsgcn_cnn_forward.1} parent=1 // pred_fallthru
      _
    %738 = vsyncpa [#allocation3], 1
    %739 = vsyncpa [#allocation5], 1

</llo_original>
